<compile_context>
chip_gen: v5e
topology: v5e:2x2
jax: 0.10.0
libtpu: 0.0.40
codegen_flags: <defaults>
</compile_context>

<pallas_src>
import functools

import jax
import jax.numpy as jnp
from jax import lax
from jax.experimental import pallas as pl
from jax.experimental.pallas import tpu as pltpu


def _round_up(x, m):
    return ((x + m - 1) // m) * m


def _make_conv_bn_relu_kernel(k, padding, W, M, Cin_p):
    """Kernel specialized to static conv geometry (k, padding, W, M, Cin_p)."""
    p = padding

    def kernel(w_ref, x_ref, scale_ref, bias_ref, o_ref):
        # w_ref:     (k*k, Cout, Cin_p)  bf16  per-tap weight matrices
        # x_ref:     (1, Cin_p, L_pad)   bf16  flattened, row-padded sample
        # scale_ref: (Cout, 1)           f32   folded BN scale (gamma / sqrt(var+eps))
        # bias_ref:  (Cout, 1)           f32   folded BN bias  (beta - mean * scale)
        # o_ref:     (1, Cout, M)        out   flattened (Cout, Ho*W) output
        x_flat = x_ref[0]                          # (Cin_p, L_pad) bf16
        cout = o_ref.shape[1]

        # Column (wo) index of every output lane, used to zero reads that would
        # otherwise wrap across image rows (horizontal zero padding).
        masks = {}
        if any((j - p) != 0 for j in range(k)):
            col = lax.broadcasted_iota(jnp.int32, (Cin_p, M), 1) % W
            for j in range(k):
                dj = j - p
                if dj != 0:
                    masks[dj] = jnp.logical_and(col + dj >= 0, col + dj < W)

        acc = jnp.zeros((cout, M), jnp.float32)
        t = 0
        for i in range(k):
            for j in range(k):
                dj = j - p
                start = i * W + j                  # static slice offset
                tap = x_flat[:, start:start + M]   # (Cin_p, M) bf16
                if dj != 0:
                    tap = jnp.where(masks[dj], tap, jnp.zeros_like(tap))
                acc = acc + jnp.dot(w_ref[t], tap,
                                    preferred_element_type=jnp.float32)
                t += 1

        y = acc * scale_ref[...] + bias_ref[...]
        o_ref[0] = jnp.maximum(y, 0.0).astype(o_ref.dtype)

    return kernel


def basic_conv_forward(x, conv_weight, bn_gamma, bn_beta, bn_mean, bn_var,
                       *, kernel_size, padding, eps=1e-5,
                       out_dtype=jnp.bfloat16):
    """BasicConv forward: Conv2d(bias=False, stride=1) -> BN(eval) -> ReLU."""
    N, Cin, H, W = x.shape
    Cout = conv_weight.shape[0]
    k = kernel_size
    p = padding
    assert conv_weight.shape == (Cout, Cin, k, k)
    if 2 * p > k - 1:
        raise NotImplementedError("only 2*padding <= kernel_size-1 supported")

    Ho = H + 2 * p - k + 1
    Wo = W + 2 * p - k + 1
    assert Ho >= 1 and Wo >= 1
    M = Ho * W                      # per-sample flat output length (row stride W)

    Cin_p = _round_up(Cin, 8)       # contraction dim padded to a sublane multiple

    # Flattened per-sample buffer layout:
    #   [ front zeros (= p alignment + p top pad rows) | H*W image | zeros ]
    # so that tap (i, j) for output m reads buffer[m + i*W + j].
    front = p * (W + 1)
    required = (k - 1) * (W + 1) + M
    L_pad = _round_up(max(required, front + H * W), 128)

    # Single bf16 cast + pad pass over x (no f32 im2col materialization).
    x_flat = x.astype(jnp.bfloat16).reshape(N, Cin, H * W)
    x_flat = jnp.pad(
        x_flat, ((0, 0), (0, Cin_p - Cin), (front, L_pad - front - H * W)))

    # Per-tap weight matrices: (k*k, Cout, Cin_p) bf16, tap t = i*k + j.
    w_taps = conv_weight.transpose(2, 3, 0, 1).reshape(k * k, Cout, Cin)
    w_taps = jnp.pad(w_taps.astype(jnp.bfloat16),
                     ((0, 0), (0, 0), (0, Cin_p - Cin)))

    # Fold eval-mode BN into a per-output-channel scale/bias epilogue.
    scale = (bn_gamma / jnp.sqrt(bn_var + eps)).astype(jnp.float32)
    bias = bn_beta.astype(jnp.float32) - bn_mean.astype(jnp.float32) * scale
    scale = scale.reshape(Cout, 1)
    bias = bias.reshape(Cout, 1)

    kernel = _make_conv_bn_relu_kernel(k, p, W, M, Cin_p)

    cost = pl.CostEstimate(
        flops=2 * N * Cout * Cin * k * k * Ho * Wo,
        transcendentals=0,
        bytes_accessed=(x_flat.size * 2 + w_taps.size * 2
                        + N * Cout * M * jnp.dtype(out_dtype).itemsize
                        + 2 * Cout * 4),
    )

    out_flat = pl.pallas_call(
        kernel,
        out_shape=jax.ShapeDtypeStruct((N, Cout, M), out_dtype),
        grid=(N,),
        in_specs=[
            pl.BlockSpec((k * k, Cout, Cin_p), lambda n: (0, 0, 0)),  # weights: resident
            pl.BlockSpec((1, Cin_p, L_pad), lambda n: (n, 0, 0)),     # one sample / step
            pl.BlockSpec((Cout, 1), lambda n: (0, 0)),                # BN scale
            pl.BlockSpec((Cout, 1), lambda n: (0, 0)),                # BN bias
        ],
        out_specs=pl.BlockSpec((1, Cout, M), lambda n: (n, 0, 0)),
        compiler_params=pltpu.CompilerParams(
            dimension_semantics=("parallel",)),
        cost_estimate=cost,
    )(w_taps, x_flat, scale, bias)

    # (N, Cout, Ho*W) -> NCHW.  Free reshape; the [:Wo] slice is a no-op for
    # "same" convs (Wo == W), no transpose / HBM round-trip.
    out = out_flat.reshape(N, Cout, Ho, W)[..., :Wo]
    return out


def _reference_forward(x, conv_weight, bn_gamma, bn_beta, bn_mean, bn_var,
                       *, kernel_size, padding, eps=1e-5):
    y = lax.conv_general_dilated(
        x, conv_weight, window_strides=(1, 1),
        padding=((padding, padding), (padding, padding)),
        dimension_numbers=("NCHW", "OIHW", "NCHW"),
        precision=lax.Precision.HIGHEST)
    scale = (bn_gamma / jnp.sqrt(bn_var + eps)).reshape(1, -1, 1, 1)
    bias = (bn_beta - bn_mean * bn_gamma / jnp.sqrt(bn_var + eps)).reshape(1, -1, 1, 1)
    return jnp.maximum(y * scale + bias, 0.0)


if __name__ == "__main__":
    # BasicConv(in_planes=4, out_planes=8, kernel_size=3, padding=1)
    N, Cin, H, W = 2, 4, 16, 16
    Cout, k, pad = 8, 3, 1

    key = jax.random.PRNGKey(0)
    kx, kw, kg, kb = jax.random.split(key, 4)

    x = jax.random.normal(kx, (N, Cin, H, W), dtype=jnp.float32)
    conv_weight = jax.random.normal(kw, (Cout, Cin, k, k), dtype=jnp.float32) * 0.1
    bn_gamma = 1.0 + 0.1 * jax.random.normal(kg, (Cout,), dtype=jnp.float32)
    bn_beta = 0.1 * jax.random.normal(kb, (Cout,), dtype=jnp.float32)
    bn_mean = jnp.zeros((Cout,), jnp.float32)   # deterministic running stats
    bn_var = jnp.ones((Cout,), jnp.float32)

    fwd = functools.partial(basic_conv_forward, kernel_size=k, padding=pad)
    out = jax.jit(fwd)(x, conv_weight, bn_gamma, bn_beta, bn_mean, bn_var)
    out = jax.block_until_ready(out)
    assert out.shape == (N, Cout, H, W)
    out_f32 = out.astype(jnp.float32)

    # Check vs. a reference fed the same bf16-rounded operands (isolates
    # kernel-structure errors from the deliberate bf16 operand/output casts).
    x_r = x.astype(jnp.bfloat16).astype(jnp.float32)
    w_r = conv_weight.astype(jnp.bfloat16).astype(jnp.float32)
    ref_bf16 = _reference_forward(x_r, w_r, bn_gamma, bn_beta, bn_mean, bn_var,
                                  kernel_size=k, padding=pad)
    assert jnp.allclose(out_f32, ref_bf16, atol=2e-2, rtol=2e-2)

    # Loose check vs. the full-f32 reference (covers bf16 rounding error).
    ref_f32 = _reference_forward(x, conv_weight, bn_gamma, bn_beta, bn_mean, bn_var,
                                 kernel_size=k, padding=pad)
    assert jnp.allclose(out_f32, ref_f32, atol=6e-2, rtol=6e-2)

    print("KERNEL_OK")
</pallas_src>

<mosaic_0001>
module attributes {stable_mosaic.version = 11 : i64} {
  func.func @kernel(%arg0: i32, %arg1: memref<9x8x8xbf16, #tpu.memory_space<vmem>>, %arg2: memref<1x8x384xbf16, #tpu.memory_space<vmem>>, %arg3: memref<8x1xf32, #tpu.memory_space<vmem>>, %arg4: memref<8x1xf32, #tpu.memory_space<vmem>>, %arg5: memref<1x8x256xbf16, #tpu.memory_space<vmem>>) attributes {dimension_semantics = [#tpu.dimension_semantics<parallel>], iteration_bounds = array<i64: 2>, scalar_prefetch = 0 : i64, scratch_operands = 0 : i64, tpu.core_type = #tpu.core_type<tc>, window_params = [{pipeline_mode = #tpu.pipeline_mode<synchronous>, transform_indices = @transform_0, window_bounds = array<i64: 9, 8, 8>}, {transform_indices = @transform_1, window_bounds = array<i64: 1, 8, 384>}, {pipeline_mode = #tpu.pipeline_mode<synchronous>, transform_indices = @transform_2, window_bounds = array<i64: 8, 1>}, {pipeline_mode = #tpu.pipeline_mode<synchronous>, transform_indices = @transform_3, window_bounds = array<i64: 8, 1>}, {transform_indices = @transform_4, window_bounds = array<i64: 1, 8, 256>}]} {
    %c0 = arith.constant 0 : index
    %c0_0 = arith.constant 0 : index
    %c0_1 = arith.constant 0 : index
    %0 = vector.load %arg2[%c0, %c0_0, %c0_1] : memref<1x8x384xbf16, #tpu.memory_space<vmem>>, vector<1x8x384xbf16>
    %1 = vector.shape_cast %0 : vector<1x8x384xbf16> to vector<8x384xbf16>
    %2 = tpu.iota {dimensions = array<i32: 1>} : vector<8x256xi32>
    %c16_i32 = arith.constant 16 : i32
    %c0_i32 = arith.constant 0 : i32
    %3 = arith.cmpi eq, %c16_i32, %c0_i32 : i32
    %c1_i32 = arith.constant 1 : i32
    %4 = arith.select %3, %c1_i32, %c16_i32 : i32
    %5 = vector.broadcast %4 : i32 to vector<8x256xi32>
    %6 = arith.remsi %2, %5 : vector<8x256xi32>
    %c0_i32_2 = arith.constant 0 : i32
    %7 = vector.broadcast %c0_i32_2 : i32 to vector<8x256xi32>
    %8 = arith.cmpi ne, %6, %7 : vector<8x256xi32>
    %c0_i32_3 = arith.constant 0 : i32
    %9 = vector.broadcast %c0_i32_3 : i32 to vector<8x256xi32>
    %10 = arith.cmpi slt, %6, %9 : vector<8x256xi32>
    %c0_i32_4 = arith.constant 0 : i32
    %11 = arith.cmpi slt, %4, %c0_i32_4 : i32
    %12 = vector.broadcast %11 : i1 to vector<8x256xi1>
    %13 = vector.broadcast %12 : vector<8x256xi1> to vector<8x256xi1>
    %14 = arith.xori %10, %13 : vector<8x256xi1>
    %15 = arith.andi %14, %8 : vector<8x256xi1>
    %16 = vector.broadcast %4 : i32 to vector<8x256xi32>
    %17 = arith.addi %6, %16 : vector<8x256xi32>
    %18 = arith.select %15, %17, %6 : vector<8x256xi1>, vector<8x256xi32>
    %c-1_i32 = arith.constant -1 : i32
    %19 = vector.broadcast %c-1_i32 : i32 to vector<8x256xi32>
    %20 = arith.addi %18, %19 : vector<8x256xi32>
    %c0_i32_5 = arith.constant 0 : i32
    %21 = vector.broadcast %c0_i32_5 : i32 to vector<8x256xi32>
    %22 = arith.cmpi sge, %20, %21 : vector<8x256xi32>
    %c-1_i32_6 = arith.constant -1 : i32
    %23 = vector.broadcast %c-1_i32_6 : i32 to vector<8x256xi32>
    %24 = arith.addi %18, %23 : vector<8x256xi32>
    %c16_i32_7 = arith.constant 16 : i32
    %25 = vector.broadcast %c16_i32_7 : i32 to vector<8x256xi32>
    %26 = arith.cmpi slt, %24, %25 : vector<8x256xi32>
    %27 = arith.andi %22, %26 : vector<8x256xi1>
    %c1_i32_8 = arith.constant 1 : i32
    %28 = vector.broadcast %c1_i32_8 : i32 to vector<8x256xi32>
    %29 = arith.addi %18, %28 : vector<8x256xi32>
    %c0_i32_9 = arith.constant 0 : i32
    %30 = vector.broadcast %c0_i32_9 : i32 to vector<8x256xi32>
    %31 = arith.cmpi sge, %29, %30 : vector<8x256xi32>
    %c1_i32_10 = arith.constant 1 : i32
    %32 = vector.broadcast %c1_i32_10 : i32 to vector<8x256xi32>
    %33 = arith.addi %18, %32 : vector<8x256xi32>
    %c16_i32_11 = arith.constant 16 : i32
    %34 = vector.broadcast %c16_i32_11 : i32 to vector<8x256xi32>
    %35 = arith.cmpi slt, %33, %34 : vector<8x256xi32>
    %36 = arith.andi %31, %35 : vector<8x256xi1>
    %cst = arith.constant 0.000000e+00 : f32
    %37 = vector.broadcast %cst : f32 to vector<8x256xf32>
    %38 = vector.extract_strided_slice %1 {offsets = [0, 0], sizes = [8, 256], strides = [1, 1]} : vector<8x384xbf16> to vector<8x256xbf16>
    %cst_12 = arith.constant 0.000000e+00 : bf16
    %39 = vector.broadcast %cst_12 : bf16 to vector<8x256xbf16>
    %40 = arith.select %27, %38, %39 : vector<8x256xi1>, vector<8x256xbf16>
    %c0_13 = arith.constant 0 : index
    %c0_14 = arith.constant 0 : index
    %c0_15 = arith.constant 0 : index
    %41 = vector.load %arg1[%c0_13, %c0_14, %c0_15] : memref<9x8x8xbf16, #tpu.memory_space<vmem>>, vector<1x8x8xbf16>
    %42 = vector.shape_cast %41 : vector<1x8x8xbf16> to vector<8x8xbf16>
    %cst_16 = arith.constant dense<0.000000e+00> : vector<8x256xf32>
    %43 = tpu.matmul %42, %40, %cst_16 {dimension_numbers = #tpu.dot_dimension_numbers<[1], [0], [0], [1], [0, 0, 1, 1], [], []>} : vector<8x8xbf16>, vector<8x256xbf16>, vector<8x256xf32> -> vector<8x256xf32>
    %44 = arith.addf %37, %43 : vector<8x256xf32>
    %45 = vector.extract_strided_slice %1 {offsets = [0, 1], sizes = [8, 256], strides = [1, 1]} : vector<8x384xbf16> to vector<8x256xbf16>
    %c1 = arith.constant 1 : index
    %c0_17 = arith.constant 0 : index
    %c0_18 = arith.constant 0 : index
    %46 = vector.load %arg1[%c1, %c0_17, %c0_18] : memref<9x8x8xbf16, #tpu.memory_space<vmem>>, vector<1x8x8xbf16>
    %47 = vector.shape_cast %46 : vector<1x8x8xbf16> to vector<8x8xbf16>
    %cst_19 = arith.constant dense<0.000000e+00> : vector<8x256xf32>
    %48 = tpu.matmul %47, %45, %cst_19 {dimension_numbers = #tpu.dot_dimension_numbers<[1], [0], [0], [1], [0, 0, 1, 1], [], []>} : vector<8x8xbf16>, vector<8x256xbf16>, vector<8x256xf32> -> vector<8x256xf32>
    %49 = arith.addf %44, %48 : vector<8x256xf32>
    %50 = vector.extract_strided_slice %1 {offsets = [0, 2], sizes = [8, 256], strides = [1, 1]} : vector<8x384xbf16> to vector<8x256xbf16>
    %cst_20 = arith.constant 0.000000e+00 : bf16
    %51 = vector.broadcast %cst_20 : bf16 to vector<8x256xbf16>
    %52 = arith.select %36, %50, %51 : vector<8x256xi1>, vector<8x256xbf16>
    %c2 = arith.constant 2 : index
    %c0_21 = arith.constant 0 : index
    %c0_22 = arith.constant 0 : index
    %53 = vector.load %arg1[%c2, %c0_21, %c0_22] : memref<9x8x8xbf16, #tpu.memory_space<vmem>>, vector<1x8x8xbf16>
    %54 = vector.shape_cast %53 : vector<1x8x8xbf16> to vector<8x8xbf16>
    %cst_23 = arith.constant dense<0.000000e+00> : vector<8x256xf32>
    %55 = tpu.matmul %54, %52, %cst_23 {dimension_numbers = #tpu.dot_dimension_numbers<[1], [0], [0], [1], [0, 0, 1, 1], [], []>} : vector<8x8xbf16>, vector<8x256xbf16>, vector<8x256xf32> -> vector<8x256xf32>
    %56 = arith.addf %49, %55 : vector<8x256xf32>
    %57 = vector.extract_strided_slice %1 {offsets = [0, 16], sizes = [8, 256], strides = [1, 1]} : vector<8x384xbf16> to vector<8x256xbf16>
    %cst_24 = arith.constant 0.000000e+00 : bf16
    %58 = vector.broadcast %cst_24 : bf16 to vector<8x256xbf16>
    %59 = arith.select %27, %57, %58 : vector<8x256xi1>, vector<8x256xbf16>
    %c3 = arith.constant 3 : index
    %c0_25 = arith.constant 0 : index
    %c0_26 = arith.constant 0 : index
    %60 = vector.load %arg1[%c3, %c0_25, %c0_26] : memref<9x8x8xbf16, #tpu.memory_space<vmem>>, vector<1x8x8xbf16>
    %61 = vector.shape_cast %60 : vector<1x8x8xbf16> to vector<8x8xbf16>
    %cst_27 = arith.constant dense<0.000000e+00> : vector<8x256xf32>
    %62 = tpu.matmul %61, %59, %cst_27 {dimension_numbers = #tpu.dot_dimension_numbers<[1], [0], [0], [1], [0, 0, 1, 1], [], []>} : vector<8x8xbf16>, vector<8x256xbf16>, vector<8x256xf32> -> vector<8x256xf32>
    %63 = arith.addf %56, %62 : vector<8x256xf32>
    %64 = vector.extract_strided_slice %1 {offsets = [0, 17], sizes = [8, 256], strides = [1, 1]} : vector<8x384xbf16> to vector<8x256xbf16>
    %c4 = arith.constant 4 : index
    %c0_28 = arith.constant 0 : index
    %c0_29 = arith.constant 0 : index
    %65 = vector.load %arg1[%c4, %c0_28, %c0_29] : memref<9x8x8xbf16, #tpu.memory_space<vmem>>, vector<1x8x8xbf16>
    %66 = vector.shape_cast %65 : vector<1x8x8xbf16> to vector<8x8xbf16>
    %cst_30 = arith.constant dense<0.000000e+00> : vector<8x256xf32>
    %67 = tpu.matmul %66, %64, %cst_30 {dimension_numbers = #tpu.dot_dimension_numbers<[1], [0], [0], [1], [0, 0, 1, 1], [], []>} : vector<8x8xbf16>, vector<8x256xbf16>, vector<8x256xf32> -> vector<8x256xf32>
    %68 = arith.addf %63, %67 : vector<8x256xf32>
    %69 = vector.extract_strided_slice %1 {offsets = [0, 18], sizes = [8, 256], strides = [1, 1]} : vector<8x384xbf16> to vector<8x256xbf16>
    %cst_31 = arith.constant 0.000000e+00 : bf16
    %70 = vector.broadcast %cst_31 : bf16 to vector<8x256xbf16>
    %71 = arith.select %36, %69, %70 : vector<8x256xi1>, vector<8x256xbf16>
    %c5 = arith.constant 5 : index
    %c0_32 = arith.constant 0 : index
    %c0_33 = arith.constant 0 : index
    %72 = vector.load %arg1[%c5, %c0_32, %c0_33] : memref<9x8x8xbf16, #tpu.memory_space<vmem>>, vector<1x8x8xbf16>
    %73 = vector.shape_cast %72 : vector<1x8x8xbf16> to vector<8x8xbf16>
    %cst_34 = arith.constant dense<0.000000e+00> : vector<8x256xf32>
    %74 = tpu.matmul %73, %71, %cst_34 {dimension_numbers = #tpu.dot_dimension_numbers<[1], [0], [0], [1], [0, 0, 1, 1], [], []>} : vector<8x8xbf16>, vector<8x256xbf16>, vector<8x256xf32> -> vector<8x256xf32>
    %75 = arith.addf %68, %74 : vector<8x256xf32>
    %76 = vector.extract_strided_slice %1 {offsets = [0, 32], sizes = [8, 256], strides = [1, 1]} : vector<8x384xbf16> to vector<8x256xbf16>
    %cst_35 = arith.constant 0.000000e+00 : bf16
    %77 = vector.broadcast %cst_35 : bf16 to vector<8x256xbf16>
    %78 = arith.select %27, %76, %77 : vector<8x256xi1>, vector<8x256xbf16>
    %c6 = arith.constant 6 : index
    %c0_36 = arith.constant 0 : index
    %c0_37 = arith.constant 0 : index
    %79 = vector.load %arg1[%c6, %c0_36, %c0_37] : memref<9x8x8xbf16, #tpu.memory_space<vmem>>, vector<1x8x8xbf16>
    %80 = vector.shape_cast %79 : vector<1x8x8xbf16> to vector<8x8xbf16>
    %cst_38 = arith.constant dense<0.000000e+00> : vector<8x256xf32>
    %81 = tpu.matmul %80, %78, %cst_38 {dimension_numbers = #tpu.dot_dimension_numbers<[1], [0], [0], [1], [0, 0, 1, 1], [], []>} : vector<8x8xbf16>, vector<8x256xbf16>, vector<8x256xf32> -> vector<8x256xf32>
    %82 = arith.addf %75, %81 : vector<8x256xf32>
    %83 = vector.extract_strided_slice %1 {offsets = [0, 33], sizes = [8, 256], strides = [1, 1]} : vector<8x384xbf16> to vector<8x256xbf16>
    %c7 = arith.constant 7 : index
    %c0_39 = arith.constant 0 : index
    %c0_40 = arith.constant 0 : index
    %84 = vector.load %arg1[%c7, %c0_39, %c0_40] : memref<9x8x8xbf16, #tpu.memory_space<vmem>>, vector<1x8x8xbf16>
    %85 = vector.shape_cast %84 : vector<1x8x8xbf16> to vector<8x8xbf16>
    %cst_41 = arith.constant dense<0.000000e+00> : vector<8x256xf32>
    %86 = tpu.matmul %85, %83, %cst_41 {dimension_numbers = #tpu.dot_dimension_numbers<[1], [0], [0], [1], [0, 0, 1, 1], [], []>} : vector<8x8xbf16>, vector<8x256xbf16>, vector<8x256xf32> -> vector<8x256xf32>
    %87 = arith.addf %82, %86 : vector<8x256xf32>
    %88 = vector.extract_strided_slice %1 {offsets = [0, 34], sizes = [8, 256], strides = [1, 1]} : vector<8x384xbf16> to vector<8x256xbf16>
    %cst_42 = arith.constant 0.000000e+00 : bf16
    %89 = vector.broadcast %cst_42 : bf16 to vector<8x256xbf16>
    %90 = arith.select %36, %88, %89 : vector<8x256xi1>, vector<8x256xbf16>
    %c8 = arith.constant 8 : index
    %c0_43 = arith.constant 0 : index
    %c0_44 = arith.constant 0 : index
    %91 = vector.load %arg1[%c8, %c0_43, %c0_44] : memref<9x8x8xbf16, #tpu.memory_space<vmem>>, vector<1x8x8xbf16>
    %92 = vector.shape_cast %91 : vector<1x8x8xbf16> to vector<8x8xbf16>
    %cst_45 = arith.constant dense<0.000000e+00> : vector<8x256xf32>
    %93 = tpu.matmul %92, %90, %cst_45 {dimension_numbers = #tpu.dot_dimension_numbers<[1], [0], [0], [1], [0, 0, 1, 1], [], []>} : vector<8x8xbf16>, vector<8x256xbf16>, vector<8x256xf32> -> vector<8x256xf32>
    %94 = arith.addf %87, %93 : vector<8x256xf32>
    %c0_46 = arith.constant 0 : index
    %c0_47 = arith.constant 0 : index
    %95 = vector.load %arg3[%c0_46, %c0_47] : memref<8x1xf32, #tpu.memory_space<vmem>>, vector<8x1xf32>
    %96 = vector.broadcast %95 : vector<8x1xf32> to vector<8x256xf32>
    %97 = arith.mulf %94, %96 : vector<8x256xf32>
    %c0_48 = arith.constant 0 : index
    %c0_49 = arith.constant 0 : index
    %98 = vector.load %arg4[%c0_48, %c0_49] : memref<8x1xf32, #tpu.memory_space<vmem>>, vector<8x1xf32>
    %99 = vector.broadcast %98 : vector<8x1xf32> to vector<8x256xf32>
    %100 = arith.addf %97, %99 : vector<8x256xf32>
    %cst_50 = arith.constant 0.000000e+00 : f32
    %101 = vector.broadcast %cst_50 : f32 to vector<8x256xf32>
    %102 = arith.maximumf %100, %101 : vector<8x256xf32>
    %103 = arith.truncf %102 : vector<8x256xf32> to vector<8x256xbf16>
    %c0_51 = arith.constant 0 : index
    %c0_52 = arith.constant 0 : index
    %c0_53 = arith.constant 0 : index
    %104 = vector.load %arg5[%c0_51, %c0_52, %c0_53] : memref<1x8x256xbf16, #tpu.memory_space<vmem>>, vector<1x8x256xbf16>
    %105 = vector.shape_cast %104 : vector<1x8x256xbf16> to vector<8x256xbf16>
    %106 = vector.shape_cast %103 : vector<8x256xbf16> to vector<1x8x256xbf16>
    tpu.vector_store %arg5[%c0_51, %c0_52, %c0_53], %106 {strides = array<i32>} : memref<1x8x256xbf16, #tpu.memory_space<vmem>>, vector<1x8x256xbf16>,
    return
  }
  func.func @transform_0(%arg0: i32) -> (i32, i32, i32) {
    %c0_i32 = arith.constant 0 : i32
    %c0_i32_0 = arith.constant 0 : i32
    %c0_i32_1 = arith.constant 0 : i32
    %c0_i32_2 = arith.constant 0 : i32
    return %c0_i32, %c0_i32_0, %c0_i32_1 : i32, i32, i32
  }
  func.func @transform_1(%arg0: i32) -> (i32, i32, i32) {
    %c0_i32 = arith.constant 0 : i32
    %c0_i32_0 = arith.constant 0 : i32
    %c0_i32_1 = arith.constant 0 : i32
    return %arg0, %c0_i32, %c0_i32_0 : i32, i32, i32
  }
  func.func @transform_2(%arg0: i32) -> (i32, i32) {
    %c0_i32 = arith.constant 0 : i32
    %c0_i32_0 = arith.constant 0 : i32
    %c0_i32_1 = arith.constant 0 : i32
    return %c0_i32, %c0_i32_0 : i32, i32
  }
  func.func @transform_3(%arg0: i32) -> (i32, i32) {
    %c0_i32 = arith.constant 0 : i32
    %c0_i32_0 = arith.constant 0 : i32
    %c0_i32_1 = arith.constant 0 : i32
    return %c0_i32, %c0_i32_0 : i32, i32
  }
  func.func @transform_4(%arg0: i32) -> (i32, i32, i32) {
    %c0_i32 = arith.constant 0 : i32
    %c0_i32_0 = arith.constant 0 : i32
    %c0_i32_1 = arith.constant 0 : i32
    return %arg0, %c0_i32, %c0_i32_0 : i32, i32, i32
  }
}

</mosaic_0001>

<llo_original>
// kernel: basic_conv_forward.1
$region0: #{basic_conv_forward.1}
  #allocation0 [shape = 'u32[]', space=smem, size = 0x4, offset = 0x4, fixed_abs, tag = 'smem constant byte address 0x4 - core index']
  #allocation1 [shape = 'u32[72,128]{1,0:T(1,128)}', space=vmem, size = 0x9000, scoped, tag = 'internal scratch']
  %s0 = inlined_call_operand.vmem [shape: bf16[9,8,8], index: 0, kind: input, shape index: {}]
  %s1 = inlined_call_operand.vmem [shape: bf16[2,8,384], index: 1, kind: input, shape index: {}]
  %s2 = inlined_call_operand.vmem [shape: f32[8,1], index: 2, kind: input, shape index: {}]
  %s3 = inlined_call_operand.vmem [shape: f32[8,1], index: 3, kind: input, shape index: {}]
  %s4 = inlined_call_operand.vmem [shape: bf16[2,8,256], index: 4, kind: output, shape index: {}]
  %s5 = sld [smem:[#allocation0]]
  $region49: #{basic_conv_forward.1} parent=0
    _
  %s7 = ssub.s32 1, %s5
  %s8 = scalar_select 0, %s7, %s5
  loop: start=0, step=1, limit=4
  $region2: #{basic_conv_forward.1} parent=0 // loop_pre_header
    _
  $region3: #{basic_conv_forward.1} parent=0 // loop_header
    %s10 = sphi 0, %s14
    %p11 = scmp.ge.s32.totalorder %s10, 4
    %s18 = sphi 0, %s18
    %s20 = sphi 0, %s18
    %s21 = sphi 0, %s20
    %s35 = sphi 0, %s21
    %s41 = sphi 0, %s43
    %s44 = sphi 0, %s41
    %s45 = sphi 0, %s44
    %s61 = sphi 0, %s45
    %s65 = sphi 0, %s65
    %s67 = sphi 0, %s65
    %s68 = sphi 0, %s67
    %s82 = sphi 0, %s68
    %s86 = sphi 0, %s86
    %s88 = sphi 0, %s86
    %s89 = sphi 0, %s88
    %s103 = sphi 0, %s89
    %s109 = sphi 0, %s111
    %s112 = sphi 0, %s109
    %s113 = sphi 0, %s112
    %s129 = sphi 0, %s113
  $region4: #{basic_conv_forward.1} parent=0 // loop_header_branch
    %13 = sbr.rel (%p11) target = $region8
  $region5: #{basic_conv_forward.1} parent=0 // loop_body
    %s15 = ssub.s32 %s10, 1
    %s16 = ssub.s32 %s10, 2
    %s17 = sadd.s32 %s10, 1
    %s19 = sadd.s32 %s18, 1
    %p22 = scmp.eq.s32.totalorder %s10, 1
    %p23 = scmp.ne.s32.totalorder %s18, %s20
    %p24 = scmp.eq.s32.totalorder %s10, 0
    %p25 = por %p23, %p24
    %p26 = scmp.ne.s32.totalorder %s18, %s20
    %p27 = scmp.eq.s32.totalorder %s15, 1
    %p28 = por %p26, %p27
    %p29 = scmp.ne.s32.totalorder %s20, %s21
    %p30 = scmp.eq.s32.totalorder %s15, 0
    %p31 = por %p29, %p30
    %p32 = scmp.ne.s32.totalorder %s20, %s21
    %p33 = scmp.eq.s32.totalorder %s16, 1
    %p34 = por %p32, %p33
    %p36 = scmp.ne.s32.totalorder %s21, %s35
    %p37 = scmp.eq.s32.totalorder %s16, 0
    %p38 = por %p36, %p37
    %s39 = ssub.s32 %s10, %s17
    %p40 = scmp.eq.s32.totalorder %s39, 0
    %s42 = sadd.s32 %s41, 1
    %s43 = scalar_select %p40, %s41, %s42
    %p46 = pneg %p40
    %p47 = scmp.eq.s32.totalorder %s10, 1
    %p48 = por %p46, %p47
    %p49 = scmp.ne.s32.totalorder %s41, %s44
    %p50 = scmp.eq.s32.totalorder %s10, 0
    %p51 = por %p49, %p50
    %p52 = scmp.ne.s32.totalorder %s41, %s44
    %p53 = scmp.eq.s32.totalorder %s15, 1
    %p54 = por %p52, %p53
    %p55 = scmp.ne.s32.totalorder %s44, %s45
    %p56 = scmp.eq.s32.totalorder %s15, 0
    %p57 = por %p55, %p56
    %p58 = scmp.ne.s32.totalorder %s44, %s45
    %p59 = scmp.eq.s32.totalorder %s16, 1
    %p60 = por %p58, %p59
    %p62 = scmp.ne.s32.totalorder %s45, %s61
    %p63 = scmp.eq.s32.totalorder %s16, 0
    %p64 = por %p62, %p63
    %s66 = sadd.s32 %s65, 1
    %p69 = scmp.eq.s32.totalorder %s10, 1
    %p70 = scmp.ne.s32.totalorder %s65, %s67
    %p71 = scmp.eq.s32.totalorder %s10, 0
    %p72 = por %p70, %p71
    %p73 = scmp.ne.s32.totalorder %s65, %s67
    %p74 = scmp.eq.s32.totalorder %s15, 1
    %p75 = por %p73, %p74
    %p76 = scmp.ne.s32.totalorder %s67, %s68
    %p77 = scmp.eq.s32.totalorder %s15, 0
    %p78 = por %p76, %p77
    %p79 = scmp.ne.s32.totalorder %s67, %s68
    %p80 = scmp.eq.s32.totalorder %s16, 1
    %p81 = por %p79, %p80
    %p83 = scmp.ne.s32.totalorder %s68, %s82
    %p84 = scmp.eq.s32.totalorder %s16, 0
    %p85 = por %p83, %p84
    %s87 = sadd.s32 %s86, 1
    %p90 = scmp.eq.s32.totalorder %s10, 1
    %p91 = scmp.ne.s32.totalorder %s86, %s88
    %p92 = scmp.eq.s32.totalorder %s10, 0
    %p93 = por %p91, %p92
    %p94 = scmp.ne.s32.totalorder %s86, %s88
    %p95 = scmp.eq.s32.totalorder %s15, 1
    %p96 = por %p94, %p95
    %p97 = scmp.ne.s32.totalorder %s88, %s89
    %p98 = scmp.eq.s32.totalorder %s15, 0
    %p99 = por %p97, %p98
    %p100 = scmp.ne.s32.totalorder %s88, %s89
    %p101 = scmp.eq.s32.totalorder %s16, 1
    %p102 = por %p100, %p101
    %p104 = scmp.ne.s32.totalorder %s89, %s103
    %p105 = scmp.eq.s32.totalorder %s16, 0
    %p106 = por %p104, %p105
    %s107 = ssub.s32 %s10, %s17
    %p108 = scmp.eq.s32.totalorder %s107, 0
    %s110 = sadd.s32 %s109, 1
    %s111 = scalar_select %p108, %s109, %s110
    %p114 = pneg %p108
    %p115 = scmp.eq.s32.totalorder %s10, 1
    %p116 = por %p114, %p115
    %p117 = scmp.ne.s32.totalorder %s109, %s112
    %p118 = scmp.eq.s32.totalorder %s10, 0
    %p119 = por %p117, %p118
    %p120 = scmp.ne.s32.totalorder %s109, %s112
    %p121 = scmp.eq.s32.totalorder %s15, 1
    %p122 = por %p120, %p121
    %p123 = scmp.ne.s32.totalorder %s112, %s113
    %p124 = scmp.eq.s32.totalorder %s15, 0
    %p125 = por %p123, %p124
    %p126 = scmp.ne.s32.totalorder %s112, %s113
    %p127 = scmp.eq.s32.totalorder %s16, 1
    %p128 = por %p126, %p127
    %p130 = scmp.ne.s32.totalorder %s113, %s129
    %p131 = scmp.eq.s32.totalorder %s16, 0
    %p132 = por %p130, %p131
    %p133 = scmp.le.s32.totalorder 1, %s10
    %p134 = scmp.lt.s32.totalorder %s10, 3
    %p135 = pnand %p133, %p134
    %p136 = pneg %p135
    // Predicated region
    $region9: #{basic_conv_forward.1} parent=5 // pred_check
      _
    $region10: #{basic_conv_forward.1} parent=5 // pred_check_branch
      %138 = sbr.rel (%p135) target = $region12
    $region11: #{basic_conv_forward.1} parent=5 // pred_region
      %s139 = ssub.s32 %s10, 1
      // Predicated region
      $region13: #{basic_conv_forward.1} parent=11 // pred_check
        %p140 = pneg %p31
      $region14: #{basic_conv_forward.1} parent=11 // pred_check_branch
        %142 = sbr.rel (%p140) target = $region16
      $region15: #{basic_conv_forward.1} parent=11 // pred_region
        _
      $region16: #{basic_conv_forward.1} parent=11 // pred_fallthru
        _
      // Predicated region
      $region17: #{basic_conv_forward.1} parent=11 // pred_check
        %p143 = pneg %p78
      $region18: #{basic_conv_forward.1} parent=11 // pred_check_branch
        %145 = sbr.rel (%p143) target = $region20
      $region19: #{basic_conv_forward.1} parent=11 // pred_region
        _
      $region20: #{basic_conv_forward.1} parent=11 // pred_fallthru
        _
      // Predicated region
      $region21: #{basic_conv_forward.1} parent=11 // pred_check
        %p146 = pneg %p99
      $region22: #{basic_conv_forward.1} parent=11 // pred_check_branch
        %148 = sbr.rel (%p146) target = $region24
      $region23: #{basic_conv_forward.1} parent=11 // pred_region
        _
      $region24: #{basic_conv_forward.1} parent=11 // pred_fallthru
        _
    $region12: #{basic_conv_forward.1} parent=5 // pred_fallthru
      _
    %p149 = scmp.lt.s32.totalorder %s10, 2
    // Predicated region
    $region25: #{basic_conv_forward.1} parent=5 // pred_check
      %p150 = pneg %p149
    $region26: #{basic_conv_forward.1} parent=5 // pred_check_branch
      %152 = sbr.rel (%p150) target = $region28
    $region27: #{basic_conv_forward.1} parent=5 // pred_region
      // Predicated region
      $region29: #{basic_conv_forward.1} parent=27 // pred_check
        %p153 = pneg %p51
      $region30: #{basic_conv_forward.1} parent=27 // pred_check_branch
        %155 = sbr.rel (%p153) target = $region32
      $region31: #{basic_conv_forward.1} parent=27 // pred_region
        %p156 = scmp.lt.s32.totalorder %s10, 1
        %s157 = scalar_select %p156, %s10, 1
        %s158 = smul.addr %s157, 3
        %s159 = smul.addr %s158, 4
        %s160 = scalar_lea.vmem %s1, %s159
      $region32: #{basic_conv_forward.1} parent=27 // pred_fallthru
        _
    $region28: #{basic_conv_forward.1} parent=5 // pred_fallthru
      _
    %p161 = scmp.le.s32.totalorder 1, %s10
    %p162 = scmp.lt.s32.totalorder %s10, 3
    %p163 = pnand %p161, %p162
    %p164 = pneg %p163
    // Predicated region
    $region33: #{basic_conv_forward.1} parent=5 // pred_check
      _
    $region34: #{basic_conv_forward.1} parent=5 // pred_check_branch
      %166 = sbr.rel (%p163) target = $region36
    $region35: #{basic_conv_forward.1} parent=5 // pred_region
      %s167 = ssub.s32 %s10, 1
      %p168 = pneg %p31
      %p169 = pneg %p28
      %p170 = scmp.lt.s32.totalorder %s15, 1
      %s171 = scalar_select %p170, %s15, 1
      %s172 = smul.addr %s171, 3
      %s173 = smul.addr %s172, 4
      %s174 = scalar_lea.vmem %s1, %s173
      %p175 = pneg %p57
      %p176 = pneg %p54
      %p177 = pneg %p78
      %p178 = pneg %p75
      %p179 = pneg %p99
      %p180 = pneg %p96
      %p181 = pneg %p125
      %p182 = pneg %p122
      %p183 = scmp.lt.s32.totalorder %s15, 1
      %s184 = scalar_select %p183, %s15, 1
      %s185 = smul.addr %s184, 2
      %s186 = smul.addr %s185, 4
      %s187 = scalar_lea.vmem %s4, %s186
      %p188 = scmp.lt.s32.totalorder %s15, 1
      %s189 = scalar_select %p188, %s15, 1
      %s190 = smul.addr %s189, 3
      %s191 = smul.addr %s190, 4
      %s192 = scalar_lea.vmem %s1, %s191
      %p193 = scmp.lt.s32.totalorder %s15, 1
      %s194 = scalar_select %p193, %s15, 1
      %s195 = smul.addr %s194, 2
      %s196 = smul.addr %s195, 4
      %s197 = scalar_lea.vmem %s4, %s196
      %v201 = vld [vmem:[%s192] sm:$0xff]
      %v202 = vld [vmem:[%s192 + $0x8] sm:$0xf]
      %v203 = vlaneseq
      %v204 = vand.u32 %v203, 127
      %v205 = vadd.s32 %v204, 128
      %vm206 = vcmp.lt.s32.totalorder %v204, 0
      %v207 = vsub.s32 0, %v204
      %v208 = vsel %vm206, %v207, %v204
      %v209 = vshrl.u32 %v208, 4
      %v210 = vand.u32 %v208, 15
      %v211 = vsub.s32 0, %v210
      %v212 = vsel %vm206, %v211, %v210
      %vm213 = vcmp.lt.s32.totalorder %v205, 0
      %v214 = vsub.s32 0, %v205
      %v215 = vsel %vm213, %v214, %v205
      %v216 = vshrl.u32 %v215, 4
      %v217 = vand.u32 %v215, 15
      %v218 = vsub.s32 0, %v217
      %v219 = vsel %vm213, %v218, %v217
      %vm220 = vcmp.ne.s32.totalorder %v212, 0
      %vm221 = vcmp.ne.s32.totalorder %v219, 0
      %vm222 = vcmp.lt.s32.totalorder %v212, 0
      %vm223 = vcmp.lt.s32.totalorder %v219, 0
      %vm224 = vmand %vm222, %vm220
      %vm225 = vmand %vm223, %vm221
      %v226 = vadd.s32 %v212, 16
      %v227 = vadd.s32 %v219, 16
      %v228 = vsel %vm224, %v226, %v212
      %v229 = vsel %vm225, %v227, %v219
      %v230 = vadd.s32 %v228, 4294967295
      %v231 = vadd.s32 %v229, 4294967295
      %vm232 = vcmp.ge.s32.totalorder %v230, 0
      %vm233 = vcmp.ge.s32.totalorder %v231, 0
      %vm234 = vcmp.lt.s32.totalorder %v230, 16
      %vm235 = vcmp.lt.s32.totalorder %v231, 16
      %vm236 = vmand %vm232, %vm234
      %vm237 = vmand %vm233, %vm235
      %v238 = vadd.s32 %v228, 1
      %v239 = vadd.s32 %v229, 1
      %vm240 = vcmp.ge.s32.totalorder %v238, 0
      %vm241 = vcmp.ge.s32.totalorder %v239, 0
      %vm242 = vcmp.lt.s32.totalorder %v238, 16
      %vm243 = vcmp.lt.s32.totalorder %v239, 16
      %vm244 = vmand %vm240, %vm242
      %vm245 = vmand %vm241, %vm243
      %vm246 = vmpackc.low %vm237, %vm236
      %v247 = vsel %vm246, %v201, 0
      %v248 = vld [vmem:[%s0] sm:$0xf]
      %s249 = scalar_lea.vmem %s0, 4
      %v250 = vld [vmem:[%s249] sm:$0xf]
      %v253 = vunpack.c.l.b16 %v201
      %v254 = vunpack.c.h.b16 %v201
      %v255 = vunpack.c.l.b16 %v202
      %v256 = vpack.c.b16 %v253, %v253
      %v257 = vpack.c.b16 %v254, %v254
      %v258 = vpack.c.b16 %v255, %v255
      %259 = vrot.lane.b32.xlu0 %v256, 127
      %v260 = vpop.permute.xlu0 %259
      %261 = vrot.lane.b32.xlu0 %v257, 127
      %v262 = vpop.permute.xlu0 %261
      %263 = vrot.lane.b32.xlu0 %v258, 127
      %v264 = vpop.permute.xlu0 %263
      %vm265 = vcmask 1039360
      %v266 = vsel %vm265, %v260, %v262
      %v267 = vsel %vm265, %v262, %v264
      %vm268 = vcmask 64512
      %v270 = vsel %vm268, %v250, 0
      %vm272 = vcmask 1043456
      %v274 = vsel %vm272, %v266, 0
      %v277 = vsel %vm272, %v267, 0
      %279 = vmatpush.bf16.msra.mxu0 0
      %280 = vmatpush.bf16.msra.mxu0 0
      %281 = vmatpush.bf16.msra.mxu0 0
      %282 = vmatpush.bf16.msra.mxu0 0
      %283 = vmatpush.bf16.msra.mxu0 0
      %284 = vmatpush.bf16.msra.mxu0 0
      %285 = vmatpush.bf16.msra.mxu0 0
      %286 = vmatpush.bf16.msra.mxu0 %v274
      %287 = vmatmul.bf16.gmra.mxu0 %v270
      %v288 = vpop.f32.mrf.mxu0
      %v289 = vadd.f32 0.0, %v288
      %v290 = vpop.f32.mrf.mxu0
      %291 = vdwg.mxu0
      %292 = vmatpush.bf16.msra.mxu0 0
      %293 = vmatpush.bf16.msra.mxu0 0
      %294 = vmatpush.bf16.msra.mxu0 0
      %295 = vmatpush.bf16.msra.mxu0 0
      %296 = vmatpush.bf16.msra.mxu0 0
      %297 = vmatpush.bf16.msra.mxu0 0
      %298 = vmatpush.bf16.msra.mxu0 0
      %299 = vmatpush.bf16.msra.mxu0 %v277
      %300 = vmatmul.bf16.gmra.mxu0 %v270
      %v301 = vpop.f32.mrf.mxu0
      %v302 = vadd.f32 0.0, %v301
      %v303 = vpop.f32.mrf.mxu0
      %304 = vdwg.mxu0
      %v306 = vunpack.c.l.b16 %v247
      %v307 = vunpack.c.h.b16 %v247
      %v308 = vpack.c.b16 %v306, %v306
      %v309 = vpack.c.b16 %v307, %v307
      %v311 = vsel %vm268, %v248, 0
      %v314 = vsel %vm272, %v308, 0
      %v317 = vsel %vm272, %v309, 0
      %319 = vmatpush.bf16.msra.mxu0 0
      %320 = vmatpush.bf16.msra.mxu0 0
      %321 = vmatpush.bf16.msra.mxu0 0
      %322 = vmatpush.bf16.msra.mxu0 0
      %323 = vmatpush.bf16.msra.mxu0 0
      %324 = vmatpush.bf16.msra.mxu0 0
      %325 = vmatpush.bf16.msra.mxu0 0
      %326 = vmatpush.bf16.msra.mxu0 %v314
      %327 = vmatmul.bf16.gmra.mxu0 %v311
      %v328 = vpop.f32.mrf.mxu0
      %v329 = vadd.f32 %v289, %v328
      %v330 = vpop.f32.mrf.mxu0
      %331 = vdwg.mxu0
      %332 = vmatpush.bf16.msra.mxu0 0
      %333 = vmatpush.bf16.msra.mxu0 0
      %334 = vmatpush.bf16.msra.mxu0 0
      %335 = vmatpush.bf16.msra.mxu0 0
      %336 = vmatpush.bf16.msra.mxu0 0
      %337 = vmatpush.bf16.msra.mxu0 0
      %338 = vmatpush.bf16.msra.mxu0 0
      %339 = vmatpush.bf16.msra.mxu0 %v317
      %340 = vmatmul.bf16.gmra.mxu0 %v311
      %v341 = vpop.f32.mrf.mxu0
      %v342 = vadd.f32 %v302, %v341
      %v343 = vpop.f32.mrf.mxu0
      %344 = vdwg.mxu0
      %vm345 = vmpackc.low %vm245, %vm244
      %v346 = vsel %vm345, 65537, 0
      %347 = vrot.lane.b32.xlu0 %v346, 2
      %v348 = vpop.permute.xlu0 %347
      %v349 = vrot.slane %v348, 4
      %vm350 = vcmask 15360
      %v351 = vsel %vm350, %v349, %v348
      %v352 = vunpack.c.l.b16 %v351
      %v353 = vunpack.c.h.b16 %v351
      %v354 = vunpack.c.l.b16 0
      %v355 = vunpack.c.h.b16 0
      %vm356 = vcmp.ne.s32.totalorder %v352, %v354
      %vm357 = vcmp.ne.s32.totalorder %v353, %v355
      %vm358 = vmpackc.low %vm357, %vm356
      %v359 = vunpack.c.l.b16 %v349
      %v360 = vunpack.c.h.b16 %v349
      %v361 = vunpack.c.l.b16 0
      %v362 = vunpack.c.h.b16 0
      %vm363 = vcmp.ne.s32.totalorder %v359, %v361
      %vm364 = vcmp.ne.s32.totalorder %v360, %v362
      %vm365 = vmpackc.low %vm364, %vm363
      %v366 = vsel %vm358, %v201, 0
      %v367 = vsel %vm365, %v202, 0
      %s368 = scalar_lea.vmem %s0, 8
      %v369 = vld [vmem:[%s368] sm:$0xf]
      %v372 = vunpack.c.l.b16 %v366
      %v373 = vunpack.c.h.b16 %v366
      %v374 = vunpack.c.l.b16 %v367
      %v375 = vpack.c.b16 %v372, %v372
      %v376 = vpack.c.b16 %v373, %v373
      %v377 = vpack.c.b16 %v374, %v374
      %378 = vrot.lane.b32.xlu0 %v375, 126
      %v379 = vpop.permute.xlu0 %378
      %380 = vrot.lane.b32.xlu0 %v376, 126
      %v381 = vpop.permute.xlu0 %380
      %382 = vrot.lane.b32.xlu0 %v377, 126
      %v383 = vpop.permute.xlu0 %382
      %vm384 = vcmask 1031168
      %v385 = vsel %vm384, %v379, %v381
      %v386 = vsel %vm384, %v381, %v383
      %v388 = vsel %vm268, %v369, 0
      %v391 = vsel %vm272, %v385, 0
      %v394 = vsel %vm272, %v386, 0
      %396 = vmatpush.bf16.msra.mxu0 0
      %397 = vmatpush.bf16.msra.mxu0 0
      %398 = vmatpush.bf16.msra.mxu0 0
      %399 = vmatpush.bf16.msra.mxu0 0
      %400 = vmatpush.bf16.msra.mxu0 0
      %401 = vmatpush.bf16.msra.mxu0 0
      %402 = vmatpush.bf16.msra.mxu0 0
      %403 = vmatpush.bf16.msra.mxu0 %v391
      %404 = vmatmul.bf16.gmra.mxu0 %v388
      %v405 = vpop.f32.mrf.mxu0
      %v406 = vadd.f32 0.0, %v405
      %v407 = vpop.f32.mrf.mxu0
      %408 = vdwg.mxu0
      %409 = vmatpush.bf16.msra.mxu0 0
      %410 = vmatpush.bf16.msra.mxu0 0
      %411 = vmatpush.bf16.msra.mxu0 0
      %412 = vmatpush.bf16.msra.mxu0 0
      %413 = vmatpush.bf16.msra.mxu0 0
      %414 = vmatpush.bf16.msra.mxu0 0
      %415 = vmatpush.bf16.msra.mxu0 0
      %416 = vmatpush.bf16.msra.mxu0 %v394
      %417 = vmatmul.bf16.gmra.mxu0 %v388
      %v418 = vpop.f32.mrf.mxu0
      %v419 = vadd.f32 0.0, %v418
      %v420 = vpop.f32.mrf.mxu0
      %421 = vdwg.mxu0
      %v422 = vadd.f32 %v329, %v406
      %v423 = vadd.f32 %v342, %v419
      %v424 = vsel %vm246, 65537, 0
      %425 = vrot.lane.b32.xlu0 %v424, 16
      %v426 = vpop.permute.xlu0 %425
      %v427 = vrot.slane %v426, 4
      %vm428 = vcmask 130048
      %v429 = vsel %vm428, %v427, %v426
      %v430 = vunpack.c.l.b16 %v429
      %v431 = vunpack.c.h.b16 %v429
      %v432 = vunpack.c.l.b16 0
      %v433 = vunpack.c.h.b16 0
      %vm434 = vcmp.ne.s32.totalorder %v430, %v432
      %vm435 = vcmp.ne.s32.totalorder %v431, %v433
      %vm436 = vmpackc.low %vm435, %vm434
      %v437 = vunpack.c.l.b16 %v427
      %v438 = vunpack.c.h.b16 %v427
      %v439 = vunpack.c.l.b16 0
      %v440 = vunpack.c.h.b16 0
      %vm441 = vcmp.ne.s32.totalorder %v437, %v439
      %vm442 = vcmp.ne.s32.totalorder %v438, %v440
      %vm443 = vmpackc.low %vm442, %vm441
      %v444 = vsel %vm436, %v201, 0
      %v445 = vsel %vm443, %v202, 0
      %s446 = scalar_lea.vmem %s0, 12
      %v447 = vld [vmem:[%s446] sm:$0xf]
      %v450 = vunpack.c.l.b16 %v444
      %v451 = vunpack.c.h.b16 %v444
      %v452 = vunpack.c.l.b16 %v445
      %v453 = vpack.c.b16 %v450, %v450
      %v454 = vpack.c.b16 %v451, %v451
      %v455 = vpack.c.b16 %v452, %v452
      %456 = vrot.lane.b32.xlu0 %v453, 112
      %v457 = vpop.permute.xlu0 %456
      %458 = vrot.lane.b32.xlu0 %v454, 112
      %v459 = vpop.permute.xlu0 %458
      %460 = vrot.lane.b32.xlu0 %v455, 112
      %v461 = vpop.permute.xlu0 %460
      %vm462 = vcmask 916480
      %v463 = vsel %vm462, %v457, %v459
      %v464 = vsel %vm462, %v459, %v461
      %v466 = vsel %vm268, %v447, 0
      %v469 = vsel %vm272, %v463, 0
      %v472 = vsel %vm272, %v464, 0
      %474 = vmatpush.bf16.msra.mxu0 0
      %475 = vmatpush.bf16.msra.mxu0 0
      %476 = vmatpush.bf16.msra.mxu0 0
      %477 = vmatpush.bf16.msra.mxu0 0
      %478 = vmatpush.bf16.msra.mxu0 0
      %479 = vmatpush.bf16.msra.mxu0 0
      %480 = vmatpush.bf16.msra.mxu0 0
      %481 = vmatpush.bf16.msra.mxu0 %v469
      %482 = vmatmul.bf16.gmra.mxu0 %v466
      %v483 = vpop.f32.mrf.mxu0
      %v484 = vadd.f32 0.0, %v483
      %v485 = vpop.f32.mrf.mxu0
      %486 = vdwg.mxu0
      %487 = vmatpush.bf16.msra.mxu0 0
      %488 = vmatpush.bf16.msra.mxu0 0
      %489 = vmatpush.bf16.msra.mxu0 0
      %490 = vmatpush.bf16.msra.mxu0 0
      %491 = vmatpush.bf16.msra.mxu0 0
      %492 = vmatpush.bf16.msra.mxu0 0
      %493 = vmatpush.bf16.msra.mxu0 0
      %494 = vmatpush.bf16.msra.mxu0 %v472
      %495 = vmatmul.bf16.gmra.mxu0 %v466
      %v496 = vpop.f32.mrf.mxu0
      %v497 = vadd.f32 0.0, %v496
      %v498 = vpop.f32.mrf.mxu0
      %499 = vdwg.mxu0
      %v500 = vadd.f32 %v422, %v484
      %v501 = vadd.f32 %v423, %v497
      %s502 = scalar_lea.vmem %s0, 16
      %v503 = vld [vmem:[%s502] sm:$0xf]
      %504 = vrot.lane.b32.xlu0 %v256, 111
      %v505 = vpop.permute.xlu0 %504
      %506 = vrot.lane.b32.xlu0 %v257, 111
      %v507 = vpop.permute.xlu0 %506
      %508 = vrot.lane.b32.xlu0 %v258, 111
      %v509 = vpop.permute.xlu0 %508
      %vm510 = vcmask 908288
      %v511 = vsel %vm510, %v505, %v507
      %v512 = vsel %vm510, %v507, %v509
      %v514 = vsel %vm268, %v503, 0
      %v517 = vsel %vm272, %v511, 0
      %v520 = vsel %vm272, %v512, 0
      %522 = vmatpush.bf16.msra.mxu0 0
      %523 = vmatpush.bf16.msra.mxu0 0
      %524 = vmatpush.bf16.msra.mxu0 0
      %525 = vmatpush.bf16.msra.mxu0 0
      %526 = vmatpush.bf16.msra.mxu0 0
      %527 = vmatpush.bf16.msra.mxu0 0
      %528 = vmatpush.bf16.msra.mxu0 0
      %529 = vmatpush.bf16.msra.mxu0 %v517
      %530 = vmatmul.bf16.gmra.mxu0 %v514
      %v531 = vpop.f32.mrf.mxu0
      %v532 = vadd.f32 0.0, %v531
      %v533 = vpop.f32.mrf.mxu0
      %534 = vdwg.mxu0
      %535 = vmatpush.bf16.msra.mxu0 0
      %536 = vmatpush.bf16.msra.mxu0 0
      %537 = vmatpush.bf16.msra.mxu0 0
      %538 = vmatpush.bf16.msra.mxu0 0
      %539 = vmatpush.bf16.msra.mxu0 0
      %540 = vmatpush.bf16.msra.mxu0 0
      %541 = vmatpush.bf16.msra.mxu0 0
      %542 = vmatpush.bf16.msra.mxu0 %v520
      %543 = vmatmul.bf16.gmra.mxu0 %v514
      %v544 = vpop.f32.mrf.mxu0
      %v545 = vadd.f32 0.0, %v544
      %v546 = vpop.f32.mrf.mxu0
      %547 = vdwg.mxu0
      %v548 = vadd.f32 %v500, %v532
      %v549 = vadd.f32 %v501, %v545
      %550 = vrot.lane.b32.xlu0 %v346, 18
      %v551 = vpop.permute.xlu0 %550
      %v552 = vrot.slane %v551, 4
      %vm553 = vcmask 146432
      %v554 = vsel %vm553, %v552, %v551
      %v555 = vunpack.c.l.b16 %v554
      %v556 = vunpack.c.h.b16 %v554
      %v557 = vunpack.c.l.b16 0
      %v558 = vunpack.c.h.b16 0
      %vm559 = vcmp.ne.s32.totalorder %v555, %v557
      %vm560 = vcmp.ne.s32.totalorder %v556, %v558
      %vm561 = vmpackc.low %vm560, %vm559
      %v562 = vunpack.c.l.b16 %v552
      %v563 = vunpack.c.h.b16 %v552
      %v564 = vunpack.c.l.b16 0
      %v565 = vunpack.c.h.b16 0
      %vm566 = vcmp.ne.s32.totalorder %v562, %v564
      %vm567 = vcmp.ne.s32.totalorder %v563, %v565
      %vm568 = vmpackc.low %vm567, %vm566
      %v569 = vsel %vm561, %v201, 0
      %v570 = vsel %vm568, %v202, 0
      %s571 = scalar_lea.vmem %s0, 20
      %v572 = vld [vmem:[%s571] sm:$0xf]
      %v575 = vunpack.c.l.b16 %v569
      %v576 = vunpack.c.h.b16 %v569
      %v577 = vunpack.c.l.b16 %v570
      %v578 = vpack.c.b16 %v575, %v575
      %v579 = vpack.c.b16 %v576, %v576
      %v580 = vpack.c.b16 %v577, %v577
      %581 = vrot.lane.b32.xlu0 %v578, 110
      %v582 = vpop.permute.xlu0 %581
      %583 = vrot.lane.b32.xlu0 %v579, 110
      %v584 = vpop.permute.xlu0 %583
      %585 = vrot.lane.b32.xlu0 %v580, 110
      %v586 = vpop.permute.xlu0 %585
      %vm587 = vcmask 900096
      %v588 = vsel %vm587, %v582, %v584
      %v589 = vsel %vm587, %v584, %v586
      %v591 = vsel %vm268, %v572, 0
      %v594 = vsel %vm272, %v588, 0
      %v597 = vsel %vm272, %v589, 0
      %599 = vmatpush.bf16.msra.mxu0 0
      %600 = vmatpush.bf16.msra.mxu0 0
      %601 = vmatpush.bf16.msra.mxu0 0
      %602 = vmatpush.bf16.msra.mxu0 0
      %603 = vmatpush.bf16.msra.mxu0 0
      %604 = vmatpush.bf16.msra.mxu0 0
      %605 = vmatpush.bf16.msra.mxu0 0
      %606 = vmatpush.bf16.msra.mxu0 %v594
      %607 = vmatmul.bf16.gmra.mxu0 %v591
      %v608 = vpop.f32.mrf.mxu0
      %v609 = vadd.f32 0.0, %v608
      %v610 = vpop.f32.mrf.mxu0
      %611 = vdwg.mxu0
      %612 = vmatpush.bf16.msra.mxu0 0
      %613 = vmatpush.bf16.msra.mxu0 0
      %614 = vmatpush.bf16.msra.mxu0 0
      %615 = vmatpush.bf16.msra.mxu0 0
      %616 = vmatpush.bf16.msra.mxu0 0
      %617 = vmatpush.bf16.msra.mxu0 0
      %618 = vmatpush.bf16.msra.mxu0 0
      %619 = vmatpush.bf16.msra.mxu0 %v597
      %620 = vmatmul.bf16.gmra.mxu0 %v591
      %v621 = vpop.f32.mrf.mxu0
      %v622 = vadd.f32 0.0, %v621
      %v623 = vpop.f32.mrf.mxu0
      %624 = vdwg.mxu0
      %v625 = vadd.f32 %v548, %v609
      %v626 = vadd.f32 %v549, %v622
      %627 = vrot.lane.b32.xlu0 %v424, 32
      %v628 = vpop.permute.xlu0 %627
      %v629 = vrot.slane %v628, 4
      %vm630 = vcmask 261120
      %v631 = vsel %vm630, %v629, %v628
      %v632 = vunpack.c.l.b16 %v631
      %v633 = vunpack.c.h.b16 %v631
      %v634 = vunpack.c.l.b16 0
      %v635 = vunpack.c.h.b16 0
      %vm636 = vcmp.ne.s32.totalorder %v632, %v634
      %vm637 = vcmp.ne.s32.totalorder %v633, %v635
      %vm638 = vmpackc.low %vm637, %vm636
      %v639 = vunpack.c.l.b16 %v629
      %v640 = vunpack.c.h.b16 %v629
      %v641 = vunpack.c.l.b16 0
      %v642 = vunpack.c.h.b16 0
      %vm643 = vcmp.ne.s32.totalorder %v639, %v641
      %vm644 = vcmp.ne.s32.totalorder %v640, %v642
      %vm645 = vmpackc.low %vm644, %vm643
      %v646 = vsel %vm638, %v201, 0
      %v647 = vsel %vm645, %v202, 0
      %s648 = scalar_lea.vmem %s0, 24
      %v649 = vld [vmem:[%s648] sm:$0xf]
      %v652 = vunpack.c.l.b16 %v646
      %v653 = vunpack.c.h.b16 %v646
      %v654 = vunpack.c.l.b16 %v647
      %v655 = vpack.c.b16 %v652, %v652
      %v656 = vpack.c.b16 %v653, %v653
      %v657 = vpack.c.b16 %v654, %v654
      %658 = vrot.lane.b32.xlu0 %v655, 96
      %v659 = vpop.permute.xlu0 %658
      %660 = vrot.lane.b32.xlu0 %v656, 96
      %v661 = vpop.permute.xlu0 %660
      %662 = vrot.lane.b32.xlu0 %v657, 96
      %v663 = vpop.permute.xlu0 %662
      %vm664 = vcmask 785408
      %v665 = vsel %vm664, %v659, %v661
      %v666 = vsel %vm664, %v661, %v663
      %v668 = vsel %vm268, %v649, 0
      %v671 = vsel %vm272, %v665, 0
      %v674 = vsel %vm272, %v666, 0
      %676 = vmatpush.bf16.msra.mxu0 0
      %677 = vmatpush.bf16.msra.mxu0 0
      %678 = vmatpush.bf16.msra.mxu0 0
      %679 = vmatpush.bf16.msra.mxu0 0
      %680 = vmatpush.bf16.msra.mxu0 0
      %681 = vmatpush.bf16.msra.mxu0 0
      %682 = vmatpush.bf16.msra.mxu0 0
      %683 = vmatpush.bf16.msra.mxu0 %v671
      %684 = vmatmul.bf16.gmra.mxu0 %v668
      %v685 = vpop.f32.mrf.mxu0
      %v686 = vadd.f32 0.0, %v685
      %v687 = vpop.f32.mrf.mxu0
      %688 = vdwg.mxu0
      %689 = vmatpush.bf16.msra.mxu0 0
      %690 = vmatpush.bf16.msra.mxu0 0
      %691 = vmatpush.bf16.msra.mxu0 0
      %692 = vmatpush.bf16.msra.mxu0 0
      %693 = vmatpush.bf16.msra.mxu0 0
      %694 = vmatpush.bf16.msra.mxu0 0
      %695 = vmatpush.bf16.msra.mxu0 0
      %696 = vmatpush.bf16.msra.mxu0 %v674
      %697 = vmatmul.bf16.gmra.mxu0 %v668
      %v698 = vpop.f32.mrf.mxu0
      %v699 = vadd.f32 0.0, %v698
      %v700 = vpop.f32.mrf.mxu0
      %701 = vdwg.mxu0
      %v702 = vadd.f32 %v625, %v686
      %v703 = vadd.f32 %v626, %v699
      %s704 = scalar_lea.vmem %s0, 28
      %v705 = vld [vmem:[%s704] sm:$0xf]
      %706 = vrot.lane.b32.xlu0 %v256, 95
      %v707 = vpop.permute.xlu0 %706
      %708 = vrot.lane.b32.xlu0 %v257, 95
      %v709 = vpop.permute.xlu0 %708
      %710 = vrot.lane.b32.xlu0 %v258, 95
      %v711 = vpop.permute.xlu0 %710
      %vm712 = vcmask 777216
      %v713 = vsel %vm712, %v707, %v709
      %v714 = vsel %vm712, %v709, %v711
      %v716 = vsel %vm268, %v705, 0
      %v719 = vsel %vm272, %v713, 0
      %v722 = vsel %vm272, %v714, 0
      %724 = vmatpush.bf16.msra.mxu0 0
      %725 = vmatpush.bf16.msra.mxu0 0
      %726 = vmatpush.bf16.msra.mxu0 0
      %727 = vmatpush.bf16.msra.mxu0 0
      %728 = vmatpush.bf16.msra.mxu0 0
      %729 = vmatpush.bf16.msra.mxu0 0
      %730 = vmatpush.bf16.msra.mxu0 0
      %731 = vmatpush.bf16.msra.mxu0 %v719
      %732 = vmatmul.bf16.gmra.mxu0 %v716
      %v733 = vpop.f32.mrf.mxu0
      %v734 = vadd.f32 0.0, %v733
      %v735 = vpop.f32.mrf.mxu0
      %736 = vdwg.mxu0
      %737 = vmatpush.bf16.msra.mxu0 0
      %738 = vmatpush.bf16.msra.mxu0 0
      %739 = vmatpush.bf16.msra.mxu0 0
      %740 = vmatpush.bf16.msra.mxu0 0
      %741 = vmatpush.bf16.msra.mxu0 0
      %742 = vmatpush.bf16.msra.mxu0 0
      %743 = vmatpush.bf16.msra.mxu0 0
      %744 = vmatpush.bf16.msra.mxu0 %v722
      %745 = vmatmul.bf16.gmra.mxu0 %v716
      %v746 = vpop.f32.mrf.mxu0
      %v747 = vadd.f32 0.0, %v746
      %v748 = vpop.f32.mrf.mxu0
      %749 = vdwg.mxu0
      %v750 = vadd.f32 %v702, %v734
      %v751 = vadd.f32 %v703, %v747
      %752 = vrot.lane.b32.xlu0 %v346, 34
      %v753 = vpop.permute.xlu0 %752
      %v754 = vrot.slane %v753, 4
      %vm755 = vcmask 277504
      %v756 = vsel %vm755, %v754, %v753
      %v757 = vunpack.c.l.b16 %v756
      %v758 = vunpack.c.h.b16 %v756
      %v759 = vunpack.c.l.b16 0
      %v760 = vunpack.c.h.b16 0
      %vm761 = vcmp.ne.s32.totalorder %v757, %v759
      %vm762 = vcmp.ne.s32.totalorder %v758, %v760
      %vm763 = vmpackc.low %vm762, %vm761
      %v764 = vunpack.c.l.b16 %v754
      %v765 = vunpack.c.h.b16 %v754
      %v766 = vunpack.c.l.b16 0
      %v767 = vunpack.c.h.b16 0
      %vm768 = vcmp.ne.s32.totalorder %v764, %v766
      %vm769 = vcmp.ne.s32.totalorder %v765, %v767
      %vm770 = vmpackc.low %vm769, %vm768
      %v771 = vsel %vm763, %v201, 0
      %v772 = vsel %vm770, %v202, 0
      %s773 = scalar_lea.vmem %s0, 32
      %v774 = vld [vmem:[%s773] sm:$0xf]
      %v777 = vunpack.c.l.b16 %v771
      %v778 = vunpack.c.h.b16 %v771
      %v779 = vunpack.c.l.b16 %v772
      %v780 = vpack.c.b16 %v777, %v777
      %v781 = vpack.c.b16 %v778, %v778
      %v782 = vpack.c.b16 %v779, %v779
      %783 = vrot.lane.b32.xlu0 %v780, 94
      %v784 = vpop.permute.xlu0 %783
      %785 = vrot.lane.b32.xlu0 %v781, 94
      %v786 = vpop.permute.xlu0 %785
      %787 = vrot.lane.b32.xlu0 %v782, 94
      %v788 = vpop.permute.xlu0 %787
      %vm789 = vcmask 769024
      %v790 = vsel %vm789, %v784, %v786
      %v791 = vsel %vm789, %v786, %v788
      %v793 = vsel %vm268, %v774, 0
      %v796 = vsel %vm272, %v790, 0
      %v799 = vsel %vm272, %v791, 0
      %801 = vmatpush.bf16.msra.mxu0 0
      %802 = vmatpush.bf16.msra.mxu0 0
      %803 = vmatpush.bf16.msra.mxu0 0
      %804 = vmatpush.bf16.msra.mxu0 0
      %805 = vmatpush.bf16.msra.mxu0 0
      %806 = vmatpush.bf16.msra.mxu0 0
      %807 = vmatpush.bf16.msra.mxu0 0
      %808 = vmatpush.bf16.msra.mxu0 %v796
      %809 = vmatmul.bf16.gmra.mxu0 %v793
      %v810 = vpop.f32.mrf.mxu0
      %v811 = vadd.f32 0.0, %v810
      %v812 = vpop.f32.mrf.mxu0
      %813 = vdwg.mxu0
      %814 = vmatpush.bf16.msra.mxu0 0
      %815 = vmatpush.bf16.msra.mxu0 0
      %816 = vmatpush.bf16.msra.mxu0 0
      %817 = vmatpush.bf16.msra.mxu0 0
      %818 = vmatpush.bf16.msra.mxu0 0
      %819 = vmatpush.bf16.msra.mxu0 0
      %820 = vmatpush.bf16.msra.mxu0 0
      %821 = vmatpush.bf16.msra.mxu0 %v799
      %822 = vmatmul.bf16.gmra.mxu0 %v793
      %v823 = vpop.f32.mrf.mxu0
      %v824 = vadd.f32 0.0, %v823
      %v825 = vpop.f32.mrf.mxu0
      %826 = vdwg.mxu0
      %v827 = vadd.f32 %v750, %v811
      %v828 = vadd.f32 %v751, %v824
      %v829 = vld [vmem:[%s2] sm:$0xff]
      %831 = vset.pattern.permute.xlu0 0
      %832 = vperm.xlu0 %831, %v829
      %v833 = vpop.permute.xlu0 %832
      %v835 = vmul.f32 %v827, %v833
      %v836 = vmul.f32 %v828, %v833
      %v837 = vld [vmem:[%s3] sm:$0xff]
      %839 = vset.pattern.permute.xlu0 0
      %840 = vperm.xlu0 %839, %v837
      %v841 = vpop.permute.xlu0 %840
      %v843 = vadd.f32 %v835, %v841
      %v844 = vadd.f32 %v836, %v841
      %v845 = vmax.f32 %v843, 0.0
      %v846 = vmax.f32 %v844, 0.0
      %v847 = vpack.c.bf16 %v846, %v845
      %848 = vst [vmem:[%s197] sm:$0xff] %v847
      %p849 = scmp.lt.s32.totalorder %s15, 1
      %s850 = scalar_select %p849, %s15, 1
      %s851 = smul.addr %s850, 2
      %s852 = smul.addr %s851, 4
      %s853 = scalar_lea.vmem %s4, %s852
      // Predicated region
      $region37: #{basic_conv_forward.1} parent=35 // pred_check
        %p854 = pneg %p122
      $region38: #{basic_conv_forward.1} parent=35 // pred_check_branch
        %856 = sbr.rel (%p854) target = $region40
      $region39: #{basic_conv_forward.1} parent=35 // pred_region
        _
      $region40: #{basic_conv_forward.1} parent=35 // pred_fallthru
        _
    $region36: #{basic_conv_forward.1} parent=5 // pred_fallthru
      _
    %p857 = scmp.le.s32.totalorder 2, %s10
    // Predicated region
    $region41: #{basic_conv_forward.1} parent=5 // pred_check
      %p858 = pneg %p857
    $region42: #{basic_conv_forward.1} parent=5 // pred_check_branch
      %860 = sbr.rel (%p858) target = $region44
    $region43: #{basic_conv_forward.1} parent=5 // pred_region
      %s861 = ssub.s32 %s10, 2
      // Predicated region
      $region45: #{basic_conv_forward.1} parent=43 // pred_check
        %p862 = pneg %p128
      $region46: #{basic_conv_forward.1} parent=43 // pred_check_branch
        %864 = sbr.rel (%p862) target = $region48
      $region47: #{basic_conv_forward.1} parent=43 // pred_region
        %p865 = scmp.lt.s32.totalorder %s16, 1
        %s866 = scalar_select %p865, %s16, 1
        %s867 = smul.addr %s866, 2
        %s868 = smul.addr %s867, 4
        %s869 = scalar_lea.vmem %s4, %s868
      $region48: #{basic_conv_forward.1} parent=43 // pred_fallthru
        _
    $region44: #{basic_conv_forward.1} parent=5 // pred_fallthru
      _
  $region6: #{basic_conv_forward.1} parent=0 // loop_footer
    %s14 = sadd.s32 1, %s10
  $region7: #{basic_conv_forward.1} parent=0 // loop_footer_branch
    %9 = sbr.rel target = $region3
  $region8: #{basic_conv_forward.1} parent=0 // loop_exit
    _

</llo_original>
